<compile_context>
chip_gen: v7x
topology: tpu7x:2x2x1
jax: 0.10.0
libtpu: 0.0.40
codegen_flags: <defaults>
</compile_context>

<pallas_src>
import functools

import jax
import jax.numpy as jnp
from jax.experimental import pallas as pl
from jax.experimental.pallas import tpu as pltpu


# ---------------------------------------------------------------------------
# Capability probes / per-generation sizing
# ---------------------------------------------------------------------------

def _probe_single_buffer_weights():
    """True iff this Pallas build accepts pipeline_mode=pl.Buffered(1)."""
    try:
        def _copy(x_ref, o_ref):
            o_ref[...] = x_ref[...]

        x = jnp.zeros((8, 128), jnp.float32)
        y = pl.pallas_call(
            _copy,
            out_shape=jax.ShapeDtypeStruct((8, 128), jnp.float32),
            grid=(1,),
            in_specs=[pl.BlockSpec((8, 128), lambda i: (0, 0),
                                   pipeline_mode=pl.Buffered(1))],
            out_specs=pl.BlockSpec((8, 128), lambda i: (0, 0)),
        )(x)
        jax.block_until_ready(y)
        return True
    except Exception:
        return False


_SINGLE_BUFFER_WEIGHTS = _probe_single_buffer_weights()


def _derive_vmem_limit_bytes():
    """~70% of this generation's per-core VMEM (128 MiB v5e/v6e, 64 MiB v7x)."""
    cap = 64 << 20                      # conservative fallback (v7x-sized)
    try:
        cap = int(pltpu.get_tpu_info().vmem_capacity_bytes)
    except Exception:
        pass
    return max(16 << 20, min(int(cap * 0.7), 96 << 20))


def _use_mxu(c_in, c_out):
    """MXU whenever the contraction dim is non-trivial; unrolled VPU MACs only
    for truly tiny C_in (one vmatmul in the otherwise-idle slot beats C_in
    VALU broadcast-MACs well before C_in reaches 16)."""
    del c_out
    return c_in > 8


def _plan_tiles(N, C_in, C_out, R, resident_weight_bytes, vmem_limit_bytes,
                tr_max):
    """Pick (NB, TR): batch-fold factor and lane-dense row tile."""
    max_c = max(C_in, C_out)
    # f32 bytes of VMEM per activation column held on-chip at once:
    #   input + output tiles (each double-buffered by the pipeline)
    #   + ~2 live per-layer f32 intermediates (producer/consumer overlap).
    per_col_bytes = 4 * (2 * C_in + 2 * C_out + 2 * max_c)
    reserve = 2 << 20                            # compiler-internal headroom
    budget = max(vmem_limit_bytes - resident_weight_bytes - reserve, 1 << 20)

    tr_cap = (budget // per_col_bytes) // 128 * 128
    tr_cap = max(128, min(tr_cap, 1 << 17))      # keep single blocks sane
    if tr_max is not None:
        tr_cap = min(tr_cap, max(128, (tr_max // 128) * 128))
    tr = R if R <= tr_cap else tr_cap            # full extent or 128-multiple

    # Fold batch images into one block when the per-image tile is tiny, so
    # each DMA is >= ~1 MiB (main lever for the mem-bound small-channel case).
    nb = 1
    if tr == R and N > 1:
        per_image_bytes = C_in * R * 4
        if per_image_bytes < (512 << 10):
            nb = min(N, 8, max(1, (1 << 20) // max(per_image_bytes, 1)))
            nb = max(1, min(nb, budget // max(per_col_bytes * R, 1)))

    # v7x shards "parallel" grid axes across 2 TensorCores: keep >= 2 grid
    # steps whenever the shape allows (no-op on single-core v5e/v6e).
    if pl.cdiv(N, nb) * pl.cdiv(R, tr) == 1:
        if N >= 2:
            nb = pl.cdiv(N, 2)
        elif R >= 256:
            tr = ((pl.cdiv(R, 2) + 127) // 128) * 128
    return nb, tr


def _resident_spec(shape):
    """Constant index_map -> block stays resident across the whole grid;
    single-buffered when supported so no dead second VMEM copy."""
    zero = (0,) * len(shape)
    index_map = lambda n, r, _z=zero: _z
    if _SINGLE_BUFFER_WEIGHTS:
        return pl.BlockSpec(shape, index_map, pipeline_mode=pl.Buffered(1))
    return pl.BlockSpec(shape, index_map)


# ---------------------------------------------------------------------------
# Kernel
# ---------------------------------------------------------------------------

def _fused_mlp_kernel(x_ref, *rest, layer_is_mxu):
    """rest = (w_0, b_0, ..., w_{d-1}, b_{d-1}, out_ref).

    x_ref : (NB, C_in, TR) channel-major activation tile (lane-dense pixels)
    MXU layer i : w_i (C_out_i, C_in_i) bf16,           b_i (C_out_i, 1) f32
    VPU layer i : w_i (C_in_i, C_out_i, 1) f32 columns, b_i (C_out_i, 1) f32
    out_ref : (NB, C_out, TR)
    """
    out_ref = rest[-1]
    for b in range(x_ref.shape[0]):                  # static unroll, folded batch
        h = x_ref[b].astype(jnp.float32)             # (C_in, TR)
        for i, is_mxu in enumerate(layer_is_mxu):    # fused layers stay in VMEM
            w_ref, b_ref = rest[2 * i], rest[2 * i + 1]
            bias = b_ref[...]                        # (C_out, 1) f32
            if is_mxu:
                # bf16 operands, f32 accumulation on the MXU.
                y = jnp.dot(w_ref[...], h.astype(jnp.bfloat16),
                            preferred_element_type=jnp.float32)
            else:
                # Truly tiny contraction dim: a few VPU broadcast-MACs.
                # w_ref[c] is a resident (C_out, 1) column -> no per-iteration
                # lane extraction from a packed weight tile.
                c_out, tr = w_ref.shape[1], h.shape[1]
                y = jnp.zeros((c_out, tr), jnp.float32)
                for c in range(w_ref.shape[0]):
                    y = y + w_ref[c] * h[c:c + 1, :]
            h = jnp.maximum(y + bias, 0.0)           # bias + ReLU in f32
        out_ref[b] = h.astype(out_ref.dtype)


# ---------------------------------------------------------------------------
# Wrapper
# ---------------------------------------------------------------------------

def fused_mlp_block(x_nchw, params, *, tr_max=None, vmem_limit_bytes=None):
    """x_nchw: (N, C_in, H, W) f32; params: [(w (C_out, C_in), b (C_out,)), ...]."""
    N, C_in, H, W = x_nchw.shape
    C_out = params[-1][0].shape[0]
    R = H * W
    x3 = x_nchw.reshape(N, C_in, R)          # NCHW -> (N, C, H*W); no transpose

    layer_is_mxu = tuple(_use_mxu(w.shape[1], w.shape[0]) for (w, _) in params)

    if vmem_limit_bytes is None:
        vmem_limit_bytes = _derive_vmem_limit_bytes()

    resident_bytes = 0
    for (w, _), is_mxu in zip(params, layer_is_mxu):
        co, ci = w.shape
        resident_bytes += co * ci * (2 if is_mxu else 4) + co * 4
    if not _SINGLE_BUFFER_WEIGHTS:
        resident_bytes *= 2                  # default pipeline double-buffers

    nb, tr = _plan_tiles(N, C_in, C_out, R, resident_bytes,
                         vmem_limit_bytes, tr_max)

    flat_params, param_specs = [], []
    for (w, b), is_mxu in zip(params, layer_is_mxu):
        co, ci = w.shape
        if is_mxu:
            flat_params.append(w.astype(jnp.bfloat16))
            param_specs.append(_resident_spec((co, ci)))
        else:
            # Pre-split columns: (C_in, C_out, 1), sliced on the leading axis.
            flat_params.append(jnp.transpose(w).reshape(ci, co, 1))
            param_specs.append(_resident_spec((ci, co, 1)))
        flat_params.append(b.reshape(co, 1).astype(jnp.float32))
        param_specs.append(_resident_spec((co, 1)))

    kernel = functools.partial(_fused_mlp_kernel, layer_is_mxu=layer_is_mxu)

    out3 = pl.pallas_call(
        kernel,
        out_shape=jax.ShapeDtypeStruct((N, C_out, R), x_nchw.dtype),
        grid_spec=pltpu.PrefetchScalarGridSpec(
            num_scalar_prefetch=0,
            # cdiv grid: ragged tails are partial blocks (masked writeback),
            # no wrapper pad / slice HBM round-trips.
            grid=(pl.cdiv(N, nb), pl.cdiv(R, tr)),
            in_specs=[pl.BlockSpec((nb, C_in, tr), lambda n, r: (n, 0, r))]
            + param_specs,
            out_specs=pl.BlockSpec((nb, C_out, tr), lambda n, r: (n, 0, r)),
        ),
        compiler_params=pltpu.CompilerParams(
            dimension_semantics=("parallel", "parallel"),
            vmem_limit_bytes=vmem_limit_bytes,
        ),
    )(x3, *flat_params)

    return out3.reshape(N, C_out, H, W)


def init_mlp_block_params(key, in_features, out_features, depth_of_mlp):
    """Xavier-uniform weights (matches nn.init.xavier_uniform_ on a 1x1 conv),
    zero biases. Weights kept in PyTorch-native (out, in) layout."""
    params = []
    c_in = in_features
    for _ in range(depth_of_mlp):
        key, sub = jax.random.split(key)
        fan_in, fan_out = c_in, out_features          # kernel_size = 1x1
        bound = (6.0 / (fan_in + fan_out)) ** 0.5
        w = jax.random.uniform(
            sub, (out_features, c_in), jnp.float32, minval=-bound, maxval=bound)
        b = jnp.zeros((out_features,), jnp.float32)
        params.append((w, b))
        c_in = out_features
    return params


mlp_block_forward = jax.jit(fused_mlp_block,
                            static_argnames=("tr_max", "vmem_limit_bytes"))


# ---------------------------------------------------------------------------
# Self-test
# ---------------------------------------------------------------------------

if __name__ == "__main__":
    key = jax.random.PRNGKey(0)

    def ref_forward(x, params):
        out = x
        for (w, b) in params:
            out = jnp.maximum(
                jnp.einsum("oc,nchw->nohw", w, out) + b[None, :, None, None], 0.0)
        return out

    configs = [
        # (N, C_in, H, W, C_out, depth, tr_max)
        (2, 4, 16, 16, 8, 3, None),    # tiny channels -> VPU MAC path
        (2, 4, 18, 18, 8, 2, 128),     # R=324 with TR=128 -> masked ragged tail
        (4, 4, 8, 8, 8, 2, None),      # batch-folded blocks (NB > 1)
        (1, 32, 16, 16, 32, 2, None),  # C_in > 8 -> bf16 MXU path, N=1 grid split
    ]

    for (N, C_in, H, W, C_out, depth, tr_cap) in configs:
        key, k_x, k_p = jax.random.split(key, 3)
        x = jax.random.normal(k_x, (N, C_in, H, W), jnp.float32)
        params = init_mlp_block_params(k_p, C_in, C_out, depth)

        y = mlp_block_forward(x, params, tr_max=tr_cap)
        jax.block_until_ready(y)

        ref = ref_forward(x, params)
        assert y.shape == (N, C_out, H, W)
        uses_mxu = any(_use_mxu(w.shape[1], w.shape[0]) for (w, _) in params)
        tol = 5e-2 if uses_mxu else 1e-4   # bf16 MXU inputs vs f32 reference
        assert jnp.allclose(y, ref, atol=tol, rtol=tol), (
            f"mismatch for config {(N, C_in, H, W, C_out, depth, tr_cap)}")

    print("KERNEL_OK")
</pallas_src>

<mosaic_0001>
module attributes {stable_mosaic.version = 11 : i64} {
  func.func @_copy(%arg0: i32, %arg1: memref<8x128xf32, #tpu.memory_space<vmem>>, %arg2: memref<8x128xf32, #tpu.memory_space<vmem>>) attributes {dimension_semantics = [#tpu.dimension_semantics<arbitrary>], iteration_bounds = array<i64: 1>, scalar_prefetch = 0 : i64, scratch_operands = 0 : i64, tpu.core_type = #tpu.core_type<tc>, window_params = [{pipeline_mode = #tpu.pipeline_mode<synchronous>, transform_indices = @transform_0, window_bounds = array<i64: 8, 128>}, {pipeline_mode = #tpu.pipeline_mode<synchronous>, transform_indices = @transform_1, window_bounds = array<i64: 8, 128>}]} {
    %c0 = arith.constant 0 : index
    %c0_0 = arith.constant 0 : index
    %0 = vector.load %arg1[%c0, %c0_0] : memref<8x128xf32, #tpu.memory_space<vmem>>, vector<8x128xf32>
    %c0_1 = arith.constant 0 : index
    %c0_2 = arith.constant 0 : index
    %1 = vector.load %arg2[%c0_1, %c0_2] : memref<8x128xf32, #tpu.memory_space<vmem>>, vector<8x128xf32>
    tpu.vector_store %arg2[%c0_1, %c0_2], %0 {strides = array<i32>} : memref<8x128xf32, #tpu.memory_space<vmem>>, vector<8x128xf32>,
    return
  }
  func.func @transform_0(%arg0: i32) -> (i32, i32) {
    %c0_i32 = arith.constant 0 : i32
    %c0_i32_0 = arith.constant 0 : i32
    %c0_i32_1 = arith.constant 0 : i32
    return %c0_i32, %c0_i32_0 : i32, i32
  }
  func.func @transform_1(%arg0: i32) -> (i32, i32) {
    %c0_i32 = arith.constant 0 : i32
    %c0_i32_0 = arith.constant 0 : i32
    %c0_i32_1 = arith.constant 0 : i32
    return %c0_i32, %c0_i32_0 : i32, i32
  }
}

module attributes {stable_mosaic.version = 11 : i64} {
  func.func @_fused_mlp_kernel(%arg0: i32, %arg1: i32, %arg2: memref<1x4x256xf32, #tpu.memory_space<vmem>>, %arg3: memref<4x8x1xf32, #tpu.memory_space<vmem>>, %arg4: memref<8x1xf32, #tpu.memory_space<vmem>>, %arg5: memref<8x8x1xf32, #tpu.memory_space<vmem>>, %arg6: memref<8x1xf32, #tpu.memory_space<vmem>>, %arg7: memref<8x8x1xf32, #tpu.memory_space<vmem>>, %arg8: memref<8x1xf32, #tpu.memory_space<vmem>>, %arg9: memref<1x8x256xf32, #tpu.memory_space<vmem>>) attributes {dimension_semantics = [#tpu.dimension_semantics<parallel>, #tpu.dimension_semantics<parallel>], iteration_bounds = array<i64: 2, 1>, scalar_prefetch = 0 : i64, scratch_operands = 0 : i64, tpu.core_type = #tpu.core_type<tc>, window_params = [{transform_indices = @transform_0, window_bounds = array<i64: 1, 4, 256>}, {pipeline_mode = #tpu.pipeline_mode<synchronous>, transform_indices = @transform_1, window_bounds = array<i64: 4, 8, 1>}, {pipeline_mode = #tpu.pipeline_mode<synchronous>, transform_indices = @transform_2, window_bounds = array<i64: 8, 1>}, {pipeline_mode = #tpu.pipeline_mode<synchronous>, transform_indices = @transform_3, window_bounds = array<i64: 8, 8, 1>}, {pipeline_mode = #tpu.pipeline_mode<synchronous>, transform_indices = @transform_4, window_bounds = array<i64: 8, 1>}, {pipeline_mode = #tpu.pipeline_mode<synchronous>, transform_indices = @transform_5, window_bounds = array<i64: 8, 8, 1>}, {pipeline_mode = #tpu.pipeline_mode<synchronous>, transform_indices = @transform_6, window_bounds = array<i64: 8, 1>}, {transform_indices = @transform_7, window_bounds = array<i64: 1, 8, 256>}]} {
    %c0 = arith.constant 0 : index
    %c0_0 = arith.constant 0 : index
    %c0_1 = arith.constant 0 : index
    %0 = vector.load %arg2[%c0, %c0_0, %c0_1] : memref<1x4x256xf32, #tpu.memory_space<vmem>>, vector<1x4x256xf32>
    %1 = vector.shape_cast %0 : vector<1x4x256xf32> to vector<4x256xf32>
    %c0_2 = arith.constant 0 : index
    %c0_3 = arith.constant 0 : index
    %2 = vector.load %arg4[%c0_2, %c0_3] : memref<8x1xf32, #tpu.memory_space<vmem>>, vector<8x1xf32>
    %cst = arith.constant 0.000000e+00 : f32
    %3 = vector.broadcast %cst : f32 to vector<8x256xf32>
    %c0_4 = arith.constant 0 : index
    %c0_5 = arith.constant 0 : index
    %c0_6 = arith.constant 0 : index
    %4 = vector.load %arg3[%c0_4, %c0_5, %c0_6] : memref<4x8x1xf32, #tpu.memory_space<vmem>>, vector<1x8x1xf32>
    %5 = vector.shape_cast %4 : vector<1x8x1xf32> to vector<8x1xf32>
    %6 = vector.extract_strided_slice %1 {offsets = [0, 0], sizes = [1, 256], strides = [1, 1]} : vector<4x256xf32> to vector<1x256xf32>
    %7 = vector.broadcast %5 : vector<8x1xf32> to vector<8x256xf32>
    %8 = vector.broadcast %6 : vector<1x256xf32> to vector<8x256xf32>
    %9 = arith.mulf %7, %8 : vector<8x256xf32>
    %10 = arith.addf %3, %9 : vector<8x256xf32>
    %c1 = arith.constant 1 : index
    %c0_7 = arith.constant 0 : index
    %c0_8 = arith.constant 0 : index
    %11 = vector.load %arg3[%c1, %c0_7, %c0_8] : memref<4x8x1xf32, #tpu.memory_space<vmem>>, vector<1x8x1xf32>
    %12 = vector.shape_cast %11 : vector<1x8x1xf32> to vector<8x1xf32>
    %13 = vector.extract_strided_slice %1 {offsets = [1, 0], sizes = [1, 256], strides = [1, 1]} : vector<4x256xf32> to vector<1x256xf32>
    %14 = vector.broadcast %12 : vector<8x1xf32> to vector<8x256xf32>
    %15 = vector.broadcast %13 : vector<1x256xf32> to vector<8x256xf32>
    %16 = arith.mulf %14, %15 : vector<8x256xf32>
    %17 = arith.addf %10, %16 : vector<8x256xf32>
    %c2 = arith.constant 2 : index
    %c0_9 = arith.constant 0 : index
    %c0_10 = arith.constant 0 : index
    %18 = vector.load %arg3[%c2, %c0_9, %c0_10] : memref<4x8x1xf32, #tpu.memory_space<vmem>>, vector<1x8x1xf32>
    %19 = vector.shape_cast %18 : vector<1x8x1xf32> to vector<8x1xf32>
    %20 = vector.extract_strided_slice %1 {offsets = [2, 0], sizes = [1, 256], strides = [1, 1]} : vector<4x256xf32> to vector<1x256xf32>
    %21 = vector.broadcast %19 : vector<8x1xf32> to vector<8x256xf32>
    %22 = vector.broadcast %20 : vector<1x256xf32> to vector<8x256xf32>
    %23 = arith.mulf %21, %22 : vector<8x256xf32>
    %24 = arith.addf %17, %23 : vector<8x256xf32>
    %c3 = arith.constant 3 : index
    %c0_11 = arith.constant 0 : index
    %c0_12 = arith.constant 0 : index
    %25 = vector.load %arg3[%c3, %c0_11, %c0_12] : memref<4x8x1xf32, #tpu.memory_space<vmem>>, vector<1x8x1xf32>
    %26 = vector.shape_cast %25 : vector<1x8x1xf32> to vector<8x1xf32>
    %27 = vector.extract_strided_slice %1 {offsets = [3, 0], sizes = [1, 256], strides = [1, 1]} : vector<4x256xf32> to vector<1x256xf32>
    %28 = vector.broadcast %26 : vector<8x1xf32> to vector<8x256xf32>
    %29 = vector.broadcast %27 : vector<1x256xf32> to vector<8x256xf32>
    %30 = arith.mulf %28, %29 : vector<8x256xf32>
    %31 = arith.addf %24, %30 : vector<8x256xf32>
    %32 = vector.broadcast %2 : vector<8x1xf32> to vector<8x256xf32>
    %33 = arith.addf %31, %32 : vector<8x256xf32>
    %cst_13 = arith.constant 0.000000e+00 : f32
    %34 = vector.broadcast %cst_13 : f32 to vector<8x256xf32>
    %35 = arith.maximumf %33, %34 : vector<8x256xf32>
    %c0_14 = arith.constant 0 : index
    %c0_15 = arith.constant 0 : index
    %36 = vector.load %arg6[%c0_14, %c0_15] : memref<8x1xf32, #tpu.memory_space<vmem>>, vector<8x1xf32>
    %cst_16 = arith.constant 0.000000e+00 : f32
    %37 = vector.broadcast %cst_16 : f32 to vector<8x256xf32>
    %c0_17 = arith.constant 0 : index
    %c0_18 = arith.constant 0 : index
    %c0_19 = arith.constant 0 : index
    %38 = vector.load %arg5[%c0_17, %c0_18, %c0_19] : memref<8x8x1xf32, #tpu.memory_space<vmem>>, vector<1x8x1xf32>
    %39 = vector.shape_cast %38 : vector<1x8x1xf32> to vector<8x1xf32>
    %40 = vector.extract_strided_slice %35 {offsets = [0, 0], sizes = [1, 256], strides = [1, 1]} : vector<8x256xf32> to vector<1x256xf32>
    %41 = vector.broadcast %39 : vector<8x1xf32> to vector<8x256xf32>
    %42 = vector.broadcast %40 : vector<1x256xf32> to vector<8x256xf32>
    %43 = arith.mulf %41, %42 : vector<8x256xf32>
    %44 = arith.addf %37, %43 : vector<8x256xf32>
    %c1_20 = arith.constant 1 : index
    %c0_21 = arith.constant 0 : index
    %c0_22 = arith.constant 0 : index
    %45 = vector.load %arg5[%c1_20, %c0_21, %c0_22] : memref<8x8x1xf32, #tpu.memory_space<vmem>>, vector<1x8x1xf32>
    %46 = vector.shape_cast %45 : vector<1x8x1xf32> to vector<8x1xf32>
    %47 = vector.extract_strided_slice %35 {offsets = [1, 0], sizes = [1, 256], strides = [1, 1]} : vector<8x256xf32> to vector<1x256xf32>
    %48 = vector.broadcast %46 : vector<8x1xf32> to vector<8x256xf32>
    %49 = vector.broadcast %47 : vector<1x256xf32> to vector<8x256xf32>
    %50 = arith.mulf %48, %49 : vector<8x256xf32>
    %51 = arith.addf %44, %50 : vector<8x256xf32>
    %c2_23 = arith.constant 2 : index
    %c0_24 = arith.constant 0 : index
    %c0_25 = arith.constant 0 : index
    %52 = vector.load %arg5[%c2_23, %c0_24, %c0_25] : memref<8x8x1xf32, #tpu.memory_space<vmem>>, vector<1x8x1xf32>
    %53 = vector.shape_cast %52 : vector<1x8x1xf32> to vector<8x1xf32>
    %54 = vector.extract_strided_slice %35 {offsets = [2, 0], sizes = [1, 256], strides = [1, 1]} : vector<8x256xf32> to vector<1x256xf32>
    %55 = vector.broadcast %53 : vector<8x1xf32> to vector<8x256xf32>
    %56 = vector.broadcast %54 : vector<1x256xf32> to vector<8x256xf32>
    %57 = arith.mulf %55, %56 : vector<8x256xf32>
    %58 = arith.addf %51, %57 : vector<8x256xf32>
    %c3_26 = arith.constant 3 : index
    %c0_27 = arith.constant 0 : index
    %c0_28 = arith.constant 0 : index
    %59 = vector.load %arg5[%c3_26, %c0_27, %c0_28] : memref<8x8x1xf32, #tpu.memory_space<vmem>>, vector<1x8x1xf32>
    %60 = vector.shape_cast %59 : vector<1x8x1xf32> to vector<8x1xf32>
    %61 = vector.extract_strided_slice %35 {offsets = [3, 0], sizes = [1, 256], strides = [1, 1]} : vector<8x256xf32> to vector<1x256xf32>
    %62 = vector.broadcast %60 : vector<8x1xf32> to vector<8x256xf32>
    %63 = vector.broadcast %61 : vector<1x256xf32> to vector<8x256xf32>
    %64 = arith.mulf %62, %63 : vector<8x256xf32>
    %65 = arith.addf %58, %64 : vector<8x256xf32>
    %c4 = arith.constant 4 : index
    %c0_29 = arith.constant 0 : index
    %c0_30 = arith.constant 0 : index
    %66 = vector.load %arg5[%c4, %c0_29, %c0_30] : memref<8x8x1xf32, #tpu.memory_space<vmem>>, vector<1x8x1xf32>
    %67 = vector.shape_cast %66 : vector<1x8x1xf32> to vector<8x1xf32>
    %68 = vector.extract_strided_slice %35 {offsets = [4, 0], sizes = [1, 256], strides = [1, 1]} : vector<8x256xf32> to vector<1x256xf32>
    %69 = vector.broadcast %67 : vector<8x1xf32> to vector<8x256xf32>
    %70 = vector.broadcast %68 : vector<1x256xf32> to vector<8x256xf32>
    %71 = arith.mulf %69, %70 : vector<8x256xf32>
    %72 = arith.addf %65, %71 : vector<8x256xf32>
    %c5 = arith.constant 5 : index
    %c0_31 = arith.constant 0 : index
    %c0_32 = arith.constant 0 : index
    %73 = vector.load %arg5[%c5, %c0_31, %c0_32] : memref<8x8x1xf32, #tpu.memory_space<vmem>>, vector<1x8x1xf32>
    %74 = vector.shape_cast %73 : vector<1x8x1xf32> to vector<8x1xf32>
    %75 = vector.extract_strided_slice %35 {offsets = [5, 0], sizes = [1, 256], strides = [1, 1]} : vector<8x256xf32> to vector<1x256xf32>
    %76 = vector.broadcast %74 : vector<8x1xf32> to vector<8x256xf32>
    %77 = vector.broadcast %75 : vector<1x256xf32> to vector<8x256xf32>
    %78 = arith.mulf %76, %77 : vector<8x256xf32>
    %79 = arith.addf %72, %78 : vector<8x256xf32>
    %c6 = arith.constant 6 : index
    %c0_33 = arith.constant 0 : index
    %c0_34 = arith.constant 0 : index
    %80 = vector.load %arg5[%c6, %c0_33, %c0_34] : memref<8x8x1xf32, #tpu.memory_space<vmem>>, vector<1x8x1xf32>
    %81 = vector.shape_cast %80 : vector<1x8x1xf32> to vector<8x1xf32>
    %82 = vector.extract_strided_slice %35 {offsets = [6, 0], sizes = [1, 256], strides = [1, 1]} : vector<8x256xf32> to vector<1x256xf32>
    %83 = vector.broadcast %81 : vector<8x1xf32> to vector<8x256xf32>
    %84 = vector.broadcast %82 : vector<1x256xf32> to vector<8x256xf32>
    %85 = arith.mulf %83, %84 : vector<8x256xf32>
    %86 = arith.addf %79, %85 : vector<8x256xf32>
    %c7 = arith.constant 7 : index
    %c0_35 = arith.constant 0 : index
    %c0_36 = arith.constant 0 : index
    %87 = vector.load %arg5[%c7, %c0_35, %c0_36] : memref<8x8x1xf32, #tpu.memory_space<vmem>>, vector<1x8x1xf32>
    %88 = vector.shape_cast %87 : vector<1x8x1xf32> to vector<8x1xf32>
    %89 = vector.extract_strided_slice %35 {offsets = [7, 0], sizes = [1, 256], strides = [1, 1]} : vector<8x256xf32> to vector<1x256xf32>
    %90 = vector.broadcast %88 : vector<8x1xf32> to vector<8x256xf32>
    %91 = vector.broadcast %89 : vector<1x256xf32> to vector<8x256xf32>
    %92 = arith.mulf %90, %91 : vector<8x256xf32>
    %93 = arith.addf %86, %92 : vector<8x256xf32>
    %94 = vector.broadcast %36 : vector<8x1xf32> to vector<8x256xf32>
    %95 = arith.addf %93, %94 : vector<8x256xf32>
    %cst_37 = arith.constant 0.000000e+00 : f32
    %96 = vector.broadcast %cst_37 : f32 to vector<8x256xf32>
    %97 = arith.maximumf %95, %96 : vector<8x256xf32>
    %c0_38 = arith.constant 0 : index
    %c0_39 = arith.constant 0 : index
    %98 = vector.load %arg8[%c0_38, %c0_39] : memref<8x1xf32, #tpu.memory_space<vmem>>, vector<8x1xf32>
    %cst_40 = arith.constant 0.000000e+00 : f32
    %99 = vector.broadcast %cst_40 : f32 to vector<8x256xf32>
    %c0_41 = arith.constant 0 : index
    %c0_42 = arith.constant 0 : index
    %c0_43 = arith.constant 0 : index
    %100 = vector.load %arg7[%c0_41, %c0_42, %c0_43] : memref<8x8x1xf32, #tpu.memory_space<vmem>>, vector<1x8x1xf32>
    %101 = vector.shape_cast %100 : vector<1x8x1xf32> to vector<8x1xf32>
    %102 = vector.extract_strided_slice %97 {offsets = [0, 0], sizes = [1, 256], strides = [1, 1]} : vector<8x256xf32> to vector<1x256xf32>
    %103 = vector.broadcast %101 : vector<8x1xf32> to vector<8x256xf32>
    %104 = vector.broadcast %102 : vector<1x256xf32> to vector<8x256xf32>
    %105 = arith.mulf %103, %104 : vector<8x256xf32>
    %106 = arith.addf %99, %105 : vector<8x256xf32>
    %c1_44 = arith.constant 1 : index
    %c0_45 = arith.constant 0 : index
    %c0_46 = arith.constant 0 : index
    %107 = vector.load %arg7[%c1_44, %c0_45, %c0_46] : memref<8x8x1xf32, #tpu.memory_space<vmem>>, vector<1x8x1xf32>
    %108 = vector.shape_cast %107 : vector<1x8x1xf32> to vector<8x1xf32>
    %109 = vector.extract_strided_slice %97 {offsets = [1, 0], sizes = [1, 256], strides = [1, 1]} : vector<8x256xf32> to vector<1x256xf32>
    %110 = vector.broadcast %108 : vector<8x1xf32> to vector<8x256xf32>
    %111 = vector.broadcast %109 : vector<1x256xf32> to vector<8x256xf32>
    %112 = arith.mulf %110, %111 : vector<8x256xf32>
    %113 = arith.addf %106, %112 : vector<8x256xf32>
    %c2_47 = arith.constant 2 : index
    %c0_48 = arith.constant 0 : index
    %c0_49 = arith.constant 0 : index
    %114 = vector.load %arg7[%c2_47, %c0_48, %c0_49] : memref<8x8x1xf32, #tpu.memory_space<vmem>>, vector<1x8x1xf32>
    %115 = vector.shape_cast %114 : vector<1x8x1xf32> to vector<8x1xf32>
    %116 = vector.extract_strided_slice %97 {offsets = [2, 0], sizes = [1, 256], strides = [1, 1]} : vector<8x256xf32> to vector<1x256xf32>
    %117 = vector.broadcast %115 : vector<8x1xf32> to vector<8x256xf32>
    %118 = vector.broadcast %116 : vector<1x256xf32> to vector<8x256xf32>
    %119 = arith.mulf %117, %118 : vector<8x256xf32>
    %120 = arith.addf %113, %119 : vector<8x256xf32>
    %c3_50 = arith.constant 3 : index
    %c0_51 = arith.constant 0 : index
    %c0_52 = arith.constant 0 : index
    %121 = vector.load %arg7[%c3_50, %c0_51, %c0_52] : memref<8x8x1xf32, #tpu.memory_space<vmem>>, vector<1x8x1xf32>
    %122 = vector.shape_cast %121 : vector<1x8x1xf32> to vector<8x1xf32>
    %123 = vector.extract_strided_slice %97 {offsets = [3, 0], sizes = [1, 256], strides = [1, 1]} : vector<8x256xf32> to vector<1x256xf32>
    %124 = vector.broadcast %122 : vector<8x1xf32> to vector<8x256xf32>
    %125 = vector.broadcast %123 : vector<1x256xf32> to vector<8x256xf32>
    %126 = arith.mulf %124, %125 : vector<8x256xf32>
    %127 = arith.addf %120, %126 : vector<8x256xf32>
    %c4_53 = arith.constant 4 : index
    %c0_54 = arith.constant 0 : index
    %c0_55 = arith.constant 0 : index
    %128 = vector.load %arg7[%c4_53, %c0_54, %c0_55] : memref<8x8x1xf32, #tpu.memory_space<vmem>>, vector<1x8x1xf32>
    %129 = vector.shape_cast %128 : vector<1x8x1xf32> to vector<8x1xf32>
    %130 = vector.extract_strided_slice %97 {offsets = [4, 0], sizes = [1, 256], strides = [1, 1]} : vector<8x256xf32> to vector<1x256xf32>
    %131 = vector.broadcast %129 : vector<8x1xf32> to vector<8x256xf32>
    %132 = vector.broadcast %130 : vector<1x256xf32> to vector<8x256xf32>
    %133 = arith.mulf %131, %132 : vector<8x256xf32>
    %134 = arith.addf %127, %133 : vector<8x256xf32>
    %c5_56 = arith.constant 5 : index
    %c0_57 = arith.constant 0 : index
    %c0_58 = arith.constant 0 : index
    %135 = vector.load %arg7[%c5_56, %c0_57, %c0_58] : memref<8x8x1xf32, #tpu.memory_space<vmem>>, vector<1x8x1xf32>
    %136 = vector.shape_cast %135 : vector<1x8x1xf32> to vector<8x1xf32>
    %137 = vector.extract_strided_slice %97 {offsets = [5, 0], sizes = [1, 256], strides = [1, 1]} : vector<8x256xf32> to vector<1x256xf32>
    %138 = vector.broadcast %136 : vector<8x1xf32> to vector<8x256xf32>
    %139 = vector.broadcast %137 : vector<1x256xf32> to vector<8x256xf32>
    %140 = arith.mulf %138, %139 : vector<8x256xf32>
    %141 = arith.addf %134, %140 : vector<8x256xf32>
    %c6_59 = arith.constant 6 : index
    %c0_60 = arith.constant 0 : index
    %c0_61 = arith.constant 0 : index
    %142 = vector.load %arg7[%c6_59, %c0_60, %c0_61] : memref<8x8x1xf32, #tpu.memory_space<vmem>>, vector<1x8x1xf32>
    %143 = vector.shape_cast %142 : vector<1x8x1xf32> to vector<8x1xf32>
    %144 = vector.extract_strided_slice %97 {offsets = [6, 0], sizes = [1, 256], strides = [1, 1]} : vector<8x256xf32> to vector<1x256xf32>
    %145 = vector.broadcast %143 : vector<8x1xf32> to vector<8x256xf32>
    %146 = vector.broadcast %144 : vector<1x256xf32> to vector<8x256xf32>
    %147 = arith.mulf %145, %146 : vector<8x256xf32>
    %148 = arith.addf %141, %147 : vector<8x256xf32>
    %c7_62 = arith.constant 7 : index
    %c0_63 = arith.constant 0 : index
    %c0_64 = arith.constant 0 : index
    %149 = vector.load %arg7[%c7_62, %c0_63, %c0_64] : memref<8x8x1xf32, #tpu.memory_space<vmem>>, vector<1x8x1xf32>
    %150 = vector.shape_cast %149 : vector<1x8x1xf32> to vector<8x1xf32>
    %151 = vector.extract_strided_slice %97 {offsets = [7, 0], sizes = [1, 256], strides = [1, 1]} : vector<8x256xf32> to vector<1x256xf32>
    %152 = vector.broadcast %150 : vector<8x1xf32> to vector<8x256xf32>
    %153 = vector.broadcast %151 : vector<1x256xf32> to vector<8x256xf32>
    %154 = arith.mulf %152, %153 : vector<8x256xf32>
    %155 = arith.addf %148, %154 : vector<8x256xf32>
    %156 = vector.broadcast %98 : vector<8x1xf32> to vector<8x256xf32>
    %157 = arith.addf %155, %156 : vector<8x256xf32>
    %cst_65 = arith.constant 0.000000e+00 : f32
    %158 = vector.broadcast %cst_65 : f32 to vector<8x256xf32>
    %159 = arith.maximumf %157, %158 : vector<8x256xf32>
    %c0_66 = arith.constant 0 : index
    %c0_67 = arith.constant 0 : index
    %c0_68 = arith.constant 0 : index
    %160 = vector.load %arg9[%c0_66, %c0_67, %c0_68] : memref<1x8x256xf32, #tpu.memory_space<vmem>>, vector<1x8x256xf32>
    %161 = vector.shape_cast %160 : vector<1x8x256xf32> to vector<8x256xf32>
    %162 = vector.shape_cast %159 : vector<8x256xf32> to vector<1x8x256xf32>
    tpu.vector_store %arg9[%c0_66, %c0_67, %c0_68], %162 {strides = array<i32>} : memref<1x8x256xf32, #tpu.memory_space<vmem>>, vector<1x8x256xf32>,
    return
  }
  func.func @transform_0(%arg0: i32, %arg1: i32) -> (i32, i32, i32) {
    %c0_i32 = arith.constant 0 : i32
    %c0_i32_0 = arith.constant 0 : i32
    return %arg0, %c0_i32, %arg1 : i32, i32, i32
  }
  func.func @transform_1(%arg0: i32, %arg1: i32) -> (i32, i32, i32) {
    %c0_i32 = arith.constant 0 : i32
    %c0_i32_0 = arith.constant 0 : i32
    %c0_i32_1 = arith.constant 0 : i32
    %c0_i32_2 = arith.constant 0 : i32
    return %c0_i32, %c0_i32_0, %c0_i32_1 : i32, i32, i32
  }
  func.func @transform_2(%arg0: i32, %arg1: i32) -> (i32, i32) {
    %c0_i32 = arith.constant 0 : i32
    %c0_i32_0 = arith.constant 0 : i32
    %c0_i32_1 = arith.constant 0 : i32
    return %c0_i32, %c0_i32_0 : i32, i32
  }
  func.func @transform_3(%arg0: i32, %arg1: i32) -> (i32, i32, i32) {
    %c0_i32 = arith.constant 0 : i32
    %c0_i32_0 = arith.constant 0 : i32
    %c0_i32_1 = arith.constant 0 : i32
    %c0_i32_2 = arith.constant 0 : i32
    return %c0_i32, %c0_i32_0, %c0_i32_1 : i32, i32, i32
  }
  func.func @transform_4(%arg0: i32, %arg1: i32) -> (i32, i32) {
    %c0_i32 = arith.constant 0 : i32
    %c0_i32_0 = arith.constant 0 : i32
    %c0_i32_1 = arith.constant 0 : i32
    return %c0_i32, %c0_i32_0 : i32, i32
  }
  func.func @transform_5(%arg0: i32, %arg1: i32) -> (i32, i32, i32) {
    %c0_i32 = arith.constant 0 : i32
    %c0_i32_0 = arith.constant 0 : i32
    %c0_i32_1 = arith.constant 0 : i32
    %c0_i32_2 = arith.constant 0 : i32
    return %c0_i32, %c0_i32_0, %c0_i32_1 : i32, i32, i32
  }
  func.func @transform_6(%arg0: i32, %arg1: i32) -> (i32, i32) {
    %c0_i32 = arith.constant 0 : i32
    %c0_i32_0 = arith.constant 0 : i32
    %c0_i32_1 = arith.constant 0 : i32
    return %c0_i32, %c0_i32_0 : i32, i32
  }
  func.func @transform_7(%arg0: i32, %arg1: i32) -> (i32, i32, i32) {
    %c0_i32 = arith.constant 0 : i32
    %c0_i32_0 = arith.constant 0 : i32
    return %arg0, %c0_i32, %arg1 : i32, i32, i32
  }
}

</mosaic_0001>

<llo_original>
// kernel: tpu_custom_call.1
$region0: #{tpu_custom_call.1}
  #allocation0 [shape = 'u32[]', space=smem, size = 0x4, offset = 0x4, fixed_abs, tag = 'smem constant byte address 0x4 - core index']
  #allocation1 [shape = 'u32[144,128]{1,0:T(1,128)}', space=vmem, size = 0x12000, scoped, tag = 'internal scratch']
  %s0 = inlined_call_operand.hbm [shape: f32[8,128], index: 0, kind: input, shape index: {}]
  %s1 = inlined_call_operand.hbm [shape: f32[8,128], index: 1, kind: output, shape index: {}]
  %s2 = sld [smem:[#allocation0]]
  $region18: #{tpu_custom_call.1} parent=0
    _
  %s4 = ssub.s32 1, %s2
  %s5 = scalar_select 0, %s4, %s2
  $region1: #{tpu_custom_call.1} parent=0
    #allocation2 [shape = 'u8[4096]{0}', space=vmem, size = 0x1000, scoped, tag = 'input window, operand 0, single buffered']
    #allocation3 [shape = 's32[1]{0}', space=sflag, size = 0x4, scoped, tag = 'scoped memory for tpu_custom_call.1']
    #allocation4 [shape = 's32[1]{0}', space=sflag, size = 0x4, scoped, tag = 'scoped memory for tpu_custom_call.1']
    #allocation5 [shape = 'u8[4096]{0}', space=vmem, size = 0x1000, scoped, tag = 'output window, operand 0, single buffered']
    %6 = vsyncpa [#allocation3], 0
    %7 = vsyncpa [#allocation4], 0
    // Predicated region
    $region2: #{tpu_custom_call.1} parent=1 // pred_check
      _
    $region3: #{tpu_custom_call.1} parent=1 // pred_check_branch
      %9 = sbr.rel (0) target = $region5
    $region4: #{tpu_custom_call.1} parent=1 // pred_region
      %s11 = ssub.s32 128, 128
      %12 = vsyncadd [#allocation3], %s11
      %s14 = sshll.u32 [#allocation2], 4
      %s15 = int_to_ptr.vmem [resolvable:$true] %s14
      %17 = dma.hbm_to_vmem [thread:$0]  %s0, 128, %s15, [#allocation3]
    $region5: #{tpu_custom_call.1} parent=1 // pred_fallthru
      _
    // Predicated region
    $region6: #{tpu_custom_call.1} parent=1 // pred_check
      _
    $region7: #{tpu_custom_call.1} parent=1 // pred_check_branch
      %19 = sbr.rel (0) target = $region9
    $region8: #{tpu_custom_call.1} parent=1 // pred_region
      %20 = dma.done [#allocation3], 128
    $region9: #{tpu_custom_call.1} parent=1 // pred_fallthru
      _
    %v21 = vld [vmem:[#allocation2] sm:$0xff]
    %22 = vst [vmem:[#allocation5] sm:$0xff] %v21
    // Predicated region
    $region10: #{tpu_custom_call.1} parent=1 // pred_check
      _
    $region11: #{tpu_custom_call.1} parent=1 // pred_check_branch
      %24 = sbr.rel (0) target = $region13
    $region12: #{tpu_custom_call.1} parent=1 // pred_region
      %s26 = ssub.s32 128, 128
      %27 = vsyncadd [#allocation4], %s26
      %s29 = sshll.u32 [#allocation5], 4
      %s30 = int_to_ptr.vmem [resolvable:$true] %s29
      %32 = dma.vmem_to_hbm [thread:$0]  %s30, 128, %s1, [#allocation4]
    $region13: #{tpu_custom_call.1} parent=1 // pred_fallthru
      _
    // Predicated region
    $region14: #{tpu_custom_call.1} parent=1 // pred_check
      _
    $region15: #{tpu_custom_call.1} parent=1 // pred_check_branch
      %34 = sbr.rel (0) target = $region17
    $region16: #{tpu_custom_call.1} parent=1 // pred_region
      %35 = dma.done [#allocation4], 128
    $region17: #{tpu_custom_call.1} parent=1 // pred_fallthru
      _
    %36 = vsyncpa [#allocation3], 1
    %37 = vsyncpa [#allocation4], 1

// kernel: fused_mlp_block.1
$region0: #{fused_mlp_block.1}
  #allocation0 [shape = 'u32[]', space=smem, size = 0x4, offset = 0x4, fixed_abs, tag = 'smem constant byte address 0x4 - core index']
  #allocation1 [shape = 'u32[144,128]{1,0:T(1,128)}', space=vmem, size = 0x12000, scoped, tag = 'internal scratch']
  %s0 = inlined_call_operand.vmem [shape: f32[2,4,256], index: 0, kind: input, shape index: {}]
  %s1 = inlined_call_operand.vmem [shape: f32[4,8,1], index: 1, kind: input, shape index: {}]
  %s2 = inlined_call_operand.vmem [shape: f32[8,1], index: 2, kind: input, shape index: {}]
  %s3 = inlined_call_operand.vmem [shape: f32[8,8,1], index: 3, kind: input, shape index: {}]
  %s4 = inlined_call_operand.vmem [shape: f32[8,1], index: 4, kind: input, shape index: {}]
  %s5 = inlined_call_operand.vmem [shape: f32[8,8,1], index: 5, kind: input, shape index: {}]
  %s6 = inlined_call_operand.vmem [shape: f32[8,1], index: 6, kind: input, shape index: {}]
  %s7 = inlined_call_operand.vmem [shape: f32[2,8,256], index: 7, kind: output, shape index: {}]
  %s8 = sld [smem:[#allocation0]]
  $region61: #{fused_mlp_block.1} parent=0
    _
  %s10 = ssub.s32 1, %s8
  %s11 = scalar_select 0, %s10, %s8
  loop: start=0, step=1, limit=4
  $region2: #{fused_mlp_block.1} parent=0 // loop_pre_header
    _
  $region3: #{fused_mlp_block.1} parent=0 // loop_header
    %s13 = sphi 0, %s17
    %p14 = scmp.ge.s32.totalorder %s13, 4
    %s20 = sphi 0, %s32
    %s21 = sphi 0, %s28
    %s22 = sphi 0, %s20
    %s23 = sphi 0, %s21
    %s24 = sphi 0, %s22
    %s25 = sphi 0, %s23
    %s37 = sphi 0, %s39
    %s40 = sphi 0, %s37
    %s41 = sphi 0, %s40
    %s57 = sphi 0, %s41
    %s61 = sphi 0, %s61
    %s63 = sphi 0, %s61
    %s64 = sphi 0, %s63
    %s78 = sphi 0, %s64
    %s82 = sphi 0, %s82
    %s84 = sphi 0, %s82
    %s85 = sphi 0, %s84
    %s99 = sphi 0, %s85
    %s103 = sphi 0, %s103
    %s105 = sphi 0, %s103
    %s106 = sphi 0, %s105
    %s120 = sphi 0, %s106
    %s124 = sphi 0, %s124
    %s126 = sphi 0, %s124
    %s127 = sphi 0, %s126
    %s141 = sphi 0, %s127
    %s145 = sphi 0, %s145
    %s147 = sphi 0, %s145
    %s148 = sphi 0, %s147
    %s162 = sphi 0, %s148
    %s166 = sphi 0, %s166
    %s168 = sphi 0, %s166
    %s169 = sphi 0, %s168
    %s183 = sphi 0, %s169
    %s191 = sphi 0, %s193
    %s194 = sphi 0, %s191
    %s195 = sphi 0, %s194
    %s211 = sphi 0, %s195
  $region4: #{fused_mlp_block.1} parent=0 // loop_header_branch
    %16 = sbr.rel (%p14) target = $region8
  $region5: #{fused_mlp_block.1} parent=0 // loop_body
    %s18 = ssub.s32 %s13, 1
    %s19 = ssub.s32 %s13, 2
    %s26 = sadd.s32 1, %s21
    %p27 = scmp.ge.s32.totalorder %s26, 1
    %s28 = scalar_select %p27, 0, %s26
    %s29 = sadd.s32 1, %s20
    %s30 = scalar_select %p27, %s29, %s20
    %p31 = scmp.ge.s32.totalorder %s30, 2
    %s32 = scalar_select %p31, 0, %s30
    %s33 = ssub.s32 %s20, %s32
    %s34 = ssub.s32 %s21, %s28
    %s35 = sor.u32 %s33, %s34
    %p36 = scmp.eq.s32.totalorder %s35, 0
    %s38 = sadd.s32 %s37, 1
    %s39 = scalar_select %p36, %s37, %s38
    %p42 = pneg %p36
    %p43 = scmp.eq.s32.totalorder %s13, 1
    %p44 = por %p42, %p43
    %p45 = scmp.ne.s32.totalorder %s37, %s40
    %p46 = scmp.eq.s32.totalorder %s13, 0
    %p47 = por %p45, %p46
    %p48 = scmp.ne.s32.totalorder %s37, %s40
    %p49 = scmp.eq.s32.totalorder %s18, 1
    %p50 = por %p48, %p49
    %p51 = scmp.ne.s32.totalorder %s40, %s41
    %p52 = scmp.eq.s32.totalorder %s18, 0
    %p53 = por %p51, %p52
    %p54 = scmp.ne.s32.totalorder %s40, %s41
    %p55 = scmp.eq.s32.totalorder %s19, 1
    %p56 = por %p54, %p55
    %p58 = scmp.ne.s32.totalorder %s41, %s57
    %p59 = scmp.eq.s32.totalorder %s19, 0
    %p60 = por %p58, %p59
    %s62 = sadd.s32 %s61, 1
    %p65 = scmp.eq.s32.totalorder %s13, 1
    %p66 = scmp.ne.s32.totalorder %s61, %s63
    %p67 = scmp.eq.s32.totalorder %s13, 0
    %p68 = por %p66, %p67
    %p69 = scmp.ne.s32.totalorder %s61, %s63
    %p70 = scmp.eq.s32.totalorder %s18, 1
    %p71 = por %p69, %p70
    %p72 = scmp.ne.s32.totalorder %s63, %s64
    %p73 = scmp.eq.s32.totalorder %s18, 0
    %p74 = por %p72, %p73
    %p75 = scmp.ne.s32.totalorder %s63, %s64
    %p76 = scmp.eq.s32.totalorder %s19, 1
    %p77 = por %p75, %p76
    %p79 = scmp.ne.s32.totalorder %s64, %s78
    %p80 = scmp.eq.s32.totalorder %s19, 0
    %p81 = por %p79, %p80
    %s83 = sadd.s32 %s82, 1
    %p86 = scmp.eq.s32.totalorder %s13, 1
    %p87 = scmp.ne.s32.totalorder %s82, %s84
    %p88 = scmp.eq.s32.totalorder %s13, 0
    %p89 = por %p87, %p88
    %p90 = scmp.ne.s32.totalorder %s82, %s84
    %p91 = scmp.eq.s32.totalorder %s18, 1
    %p92 = por %p90, %p91
    %p93 = scmp.ne.s32.totalorder %s84, %s85
    %p94 = scmp.eq.s32.totalorder %s18, 0
    %p95 = por %p93, %p94
    %p96 = scmp.ne.s32.totalorder %s84, %s85
    %p97 = scmp.eq.s32.totalorder %s19, 1
    %p98 = por %p96, %p97
    %p100 = scmp.ne.s32.totalorder %s85, %s99
    %p101 = scmp.eq.s32.totalorder %s19, 0
    %p102 = por %p100, %p101
    %s104 = sadd.s32 %s103, 1
    %p107 = scmp.eq.s32.totalorder %s13, 1
    %p108 = scmp.ne.s32.totalorder %s103, %s105
    %p109 = scmp.eq.s32.totalorder %s13, 0
    %p110 = por %p108, %p109
    %p111 = scmp.ne.s32.totalorder %s103, %s105
    %p112 = scmp.eq.s32.totalorder %s18, 1
    %p113 = por %p111, %p112
    %p114 = scmp.ne.s32.totalorder %s105, %s106
    %p115 = scmp.eq.s32.totalorder %s18, 0
    %p116 = por %p114, %p115
    %p117 = scmp.ne.s32.totalorder %s105, %s106
    %p118 = scmp.eq.s32.totalorder %s19, 1
    %p119 = por %p117, %p118
    %p121 = scmp.ne.s32.totalorder %s106, %s120
    %p122 = scmp.eq.s32.totalorder %s19, 0
    %p123 = por %p121, %p122
    %s125 = sadd.s32 %s124, 1
    %p128 = scmp.eq.s32.totalorder %s13, 1
    %p129 = scmp.ne.s32.totalorder %s124, %s126
    %p130 = scmp.eq.s32.totalorder %s13, 0
    %p131 = por %p129, %p130
    %p132 = scmp.ne.s32.totalorder %s124, %s126
    %p133 = scmp.eq.s32.totalorder %s18, 1
    %p134 = por %p132, %p133
    %p135 = scmp.ne.s32.totalorder %s126, %s127
    %p136 = scmp.eq.s32.totalorder %s18, 0
    %p137 = por %p135, %p136
    %p138 = scmp.ne.s32.totalorder %s126, %s127
    %p139 = scmp.eq.s32.totalorder %s19, 1
    %p140 = por %p138, %p139
    %p142 = scmp.ne.s32.totalorder %s127, %s141
    %p143 = scmp.eq.s32.totalorder %s19, 0
    %p144 = por %p142, %p143
    %s146 = sadd.s32 %s145, 1
    %p149 = scmp.eq.s32.totalorder %s13, 1
    %p150 = scmp.ne.s32.totalorder %s145, %s147
    %p151 = scmp.eq.s32.totalorder %s13, 0
    %p152 = por %p150, %p151
    %p153 = scmp.ne.s32.totalorder %s145, %s147
    %p154 = scmp.eq.s32.totalorder %s18, 1
    %p155 = por %p153, %p154
    %p156 = scmp.ne.s32.totalorder %s147, %s148
    %p157 = scmp.eq.s32.totalorder %s18, 0
    %p158 = por %p156, %p157
    %p159 = scmp.ne.s32.totalorder %s147, %s148
    %p160 = scmp.eq.s32.totalorder %s19, 1
    %p161 = por %p159, %p160
    %p163 = scmp.ne.s32.totalorder %s148, %s162
    %p164 = scmp.eq.s32.totalorder %s19, 0
    %p165 = por %p163, %p164
    %s167 = sadd.s32 %s166, 1
    %p170 = scmp.eq.s32.totalorder %s13, 1
    %p171 = scmp.ne.s32.totalorder %s166, %s168
    %p172 = scmp.eq.s32.totalorder %s13, 0
    %p173 = por %p171, %p172
    %p174 = scmp.ne.s32.totalorder %s166, %s168
    %p175 = scmp.eq.s32.totalorder %s18, 1
    %p176 = por %p174, %p175
    %p177 = scmp.ne.s32.totalorder %s168, %s169
    %p178 = scmp.eq.s32.totalorder %s18, 0
    %p179 = por %p177, %p178
    %p180 = scmp.ne.s32.totalorder %s168, %s169
    %p181 = scmp.eq.s32.totalorder %s19, 1
    %p182 = por %p180, %p181
    %p184 = scmp.ne.s32.totalorder %s169, %s183
    %p185 = scmp.eq.s32.totalorder %s19, 0
    %p186 = por %p184, %p185
    %s187 = ssub.s32 %s20, %s32
    %s188 = ssub.s32 %s21, %s28
    %s189 = sor.u32 %s187, %s188
    %p190 = scmp.eq.s32.totalorder %s189, 0
    %s192 = sadd.s32 %s191, 1
    %s193 = scalar_select %p190, %s191, %s192
    %p196 = pneg %p190
    %p197 = scmp.eq.s32.totalorder %s13, 1
    %p198 = por %p196, %p197
    %p199 = scmp.ne.s32.totalorder %s191, %s194
    %p200 = scmp.eq.s32.totalorder %s13, 0
    %p201 = por %p199, %p200
    %p202 = scmp.ne.s32.totalorder %s191, %s194
    %p203 = scmp.eq.s32.totalorder %s18, 1
    %p204 = por %p202, %p203
    %p205 = scmp.ne.s32.totalorder %s194, %s195
    %p206 = scmp.eq.s32.totalorder %s18, 0
    %p207 = por %p205, %p206
    %p208 = scmp.ne.s32.totalorder %s194, %s195
    %p209 = scmp.eq.s32.totalorder %s19, 1
    %p210 = por %p208, %p209
    %p212 = scmp.ne.s32.totalorder %s195, %s211
    %p213 = scmp.eq.s32.totalorder %s19, 0
    %p214 = por %p212, %p213
    %p215 = scmp.le.s32.totalorder 1, %s13
    %p216 = scmp.lt.s32.totalorder %s13, 3
    %p217 = pnand %p215, %p216
    %p218 = pneg %p217
    // Predicated region
    $region9: #{fused_mlp_block.1} parent=5 // pred_check
      _
    $region10: #{fused_mlp_block.1} parent=5 // pred_check_branch
      %220 = sbr.rel (%p217) target = $region12
    $region11: #{fused_mlp_block.1} parent=5 // pred_region
      %s221 = ssub.s32 %s13, 1
      // Predicated region
      $region13: #{fused_mlp_block.1} parent=11 // pred_check
        %p222 = pneg %p74
      $region14: #{fused_mlp_block.1} parent=11 // pred_check_branch
        %224 = sbr.rel (%p222) target = $region16
      $region15: #{fused_mlp_block.1} parent=11 // pred_region
        _
      $region16: #{fused_mlp_block.1} parent=11 // pred_fallthru
        _
      // Predicated region
      $region17: #{fused_mlp_block.1} parent=11 // pred_check
        %p225 = pneg %p95
      $region18: #{fused_mlp_block.1} parent=11 // pred_check_branch
        %227 = sbr.rel (%p225) target = $region20
      $region19: #{fused_mlp_block.1} parent=11 // pred_region
        _
      $region20: #{fused_mlp_block.1} parent=11 // pred_fallthru
        _
      // Predicated region
      $region21: #{fused_mlp_block.1} parent=11 // pred_check
        %p228 = pneg %p116
      $region22: #{fused_mlp_block.1} parent=11 // pred_check_branch
        %230 = sbr.rel (%p228) target = $region24
      $region23: #{fused_mlp_block.1} parent=11 // pred_region
        _
      $region24: #{fused_mlp_block.1} parent=11 // pred_fallthru
        _
      // Predicated region
      $region25: #{fused_mlp_block.1} parent=11 // pred_check
        %p231 = pneg %p137
      $region26: #{fused_mlp_block.1} parent=11 // pred_check_branch
        %233 = sbr.rel (%p231) target = $region28
      $region27: #{fused_mlp_block.1} parent=11 // pred_region
        _
      $region28: #{fused_mlp_block.1} parent=11 // pred_fallthru
        _
      // Predicated region
      $region29: #{fused_mlp_block.1} parent=11 // pred_check
        %p234 = pneg %p158
      $region30: #{fused_mlp_block.1} parent=11 // pred_check_branch
        %236 = sbr.rel (%p234) target = $region32
      $region31: #{fused_mlp_block.1} parent=11 // pred_region
        _
      $region32: #{fused_mlp_block.1} parent=11 // pred_fallthru
        _
      // Predicated region
      $region33: #{fused_mlp_block.1} parent=11 // pred_check
        %p237 = pneg %p179
      $region34: #{fused_mlp_block.1} parent=11 // pred_check_branch
        %239 = sbr.rel (%p237) target = $region36
      $region35: #{fused_mlp_block.1} parent=11 // pred_region
        _
      $region36: #{fused_mlp_block.1} parent=11 // pred_fallthru
        _
    $region12: #{fused_mlp_block.1} parent=5 // pred_fallthru
      _
    %p240 = scmp.lt.s32.totalorder %s13, 2
    // Predicated region
    $region37: #{fused_mlp_block.1} parent=5 // pred_check
      %p241 = pneg %p240
    $region38: #{fused_mlp_block.1} parent=5 // pred_check_branch
      %243 = sbr.rel (%p241) target = $region40
    $region39: #{fused_mlp_block.1} parent=5 // pred_region
      // Predicated region
      $region41: #{fused_mlp_block.1} parent=39 // pred_check
        %p244 = pneg %p47
      $region42: #{fused_mlp_block.1} parent=39 // pred_check_branch
        %246 = sbr.rel (%p244) target = $region44
      $region43: #{fused_mlp_block.1} parent=39 // pred_region
        %s247 = smul.u32 2, %s21
        %p248 = scmp.lt.s32.totalorder %s20, 1
        %s249 = scalar_select %p248, %s20, 1
        %p250 = scmp.lt.s32.totalorder %s247, 1
        %s251 = scalar_select %p250, %s247, 1
        %s252 = smul.addr %s249, 2
        %s253 = sadd.s32 %s251, %s252
        %s254 = smul.addr %s253, 4
        %s255 = scalar_lea.vmem %s0, %s254
        %s256 = smul.u32 2, %s21
      $region44: #{fused_mlp_block.1} parent=39 // pred_fallthru
        _
    $region40: #{fused_mlp_block.1} parent=5 // pred_fallthru
      _
    %p257 = scmp.le.s32.totalorder 1, %s13
    %p258 = scmp.lt.s32.totalorder %s13, 3
    %p259 = pnand %p257, %p258
    %p260 = pneg %p259
    // Predicated region
    $region45: #{fused_mlp_block.1} parent=5 // pred_check
      _
    $region46: #{fused_mlp_block.1} parent=5 // pred_check_branch
      %262 = sbr.rel (%p259) target = $region48
    $region47: #{fused_mlp_block.1} parent=5 // pred_region
      %s263 = ssub.s32 %s13, 1
      %s264 = smul.u32 2, %s23
      %p265 = scmp.lt.s32.totalorder %s22, 1
      %s266 = scalar_select %p265, %s22, 1
      %p267 = scmp.lt.s32.totalorder %s264, 1
      %s268 = scalar_select %p267, %s264, 1
      %s269 = smul.addr %s266, 2
      %s270 = sadd.s32 %s268, %s269
      %s271 = smul.addr %s270, 4
      %s272 = scalar_lea.vmem %s0, %s271
      %p273 = pneg %p53
      %p274 = pneg %p50
      %p275 = pneg %p74
      %p276 = pneg %p71
      %p277 = pneg %p95
      %p278 = pneg %p92
      %p279 = pneg %p116
      %p280 = pneg %p113
      %p281 = pneg %p137
      %p282 = pneg %p134
      %p283 = pneg %p158
      %p284 = pneg %p155
      %p285 = pneg %p179
      %p286 = pneg %p176
      %p287 = pneg %p207
      %p288 = pneg %p204
      %s289 = smul.u32 2, %s23
      %p290 = scmp.lt.s32.totalorder %s22, 1
      %s291 = scalar_select %p290, %s22, 1
      %p292 = scmp.lt.s32.totalorder %s289, 1
      %s293 = scalar_select %p292, %s289, 1
      %s294 = smul.addr %s291, 2
      %s295 = sadd.s32 %s293, %s294
      %s296 = smul.addr %s295, 8
      %s297 = scalar_lea.vmem %s7, %s296
      %s298 = smul.u32 2, %s23
      %p299 = scmp.lt.s32.totalorder %s22, 1
      %s300 = scalar_select %p299, %s22, 1
      %p301 = scmp.lt.s32.totalorder %s298, 1
      %s302 = scalar_select %p301, %s298, 1
      %s303 = smul.addr %s300, 2
      %s304 = sadd.s32 %s302, %s303
      %s305 = smul.addr %s304, 4
      %s306 = scalar_lea.vmem %s0, %s305
      %s307 = smul.u32 2, %s23
      %s308 = smul.u32 2, %s23
      %p309 = scmp.lt.s32.totalorder %s22, 1
      %s310 = scalar_select %p309, %s22, 1
      %p311 = scmp.lt.s32.totalorder %s308, 1
      %s312 = scalar_select %p311, %s308, 1
      %s313 = smul.addr %s310, 2
      %s314 = sadd.s32 %s312, %s313
      %s315 = smul.addr %s314, 8
      %s316 = scalar_lea.vmem %s7, %s315
      %s317 = smul.u32 2, %s23
      %v318 = vld [vmem:[%s306] sm:$0xff]
      %v319 = vld [vmem:[%s2] sm:$0xff]
      %v320 = vld [vmem:[%s1] sm:$0xff]
      %322 = vset.pattern.permute.xlu0 0
      %323 = vperm.xlu0 %322, %v320
      %v324 = vpop.permute.xlu0 %323
      %v327 = vlaneseq
      %v328 = vshrl.u32 %v327, 7
      %v329 = vsub.s32 0, %v328
      %v330 = vrot.slane %v318, %v329
      %v331 = vlaneseq
      %v332 = vshrl.u32 %v331, 7
      %v333 = vsub.s32 4, %v332
      %v334 = vrot.slane %v318, %v333
      %v337 = vlaneseq
      %v338 = vshrl.u32 %v337, 7
      %v339 = vsub.s32 0, %v338
      %v340 = vrot.slane %v330, %v339
      %v341 = vlaneseq
      %v342 = vshrl.u32 %v341, 7
      %v343 = vsub.s32 0, %v342
      %v344 = vrot.slane %v334, %v343
      %v345 = vmul.f32 %v324, %v340
      %v346 = vmul.f32 %v324, %v344
      %v347 = vadd.f32 %v345, 0.0
      %v348 = vadd.f32 %v346, 0.0
      %s349 = scalar_lea.vmem %s1, 8
      %v350 = vld [vmem:[%s349] sm:$0xff]
      %352 = vset.pattern.permute.xlu0 0
      %353 = vperm.xlu0 %352, %v350
      %v354 = vpop.permute.xlu0 %353
      %v356 = vlaneseq
      %v357 = vshrl.u32 %v356, 7
      %v358 = vsub.s32 1, %v357
      %v359 = vrot.slane %v318, %v358
      %v360 = vlaneseq
      %v361 = vshrl.u32 %v360, 7
      %v362 = vsub.s32 5, %v361
      %v363 = vrot.slane %v318, %v362
      %v366 = vlaneseq
      %v367 = vshrl.u32 %v366, 7
      %v368 = vsub.s32 1, %v367
      %v369 = vrot.slane %v359, %v368
      %v370 = vlaneseq
      %v371 = vshrl.u32 %v370, 7
      %v372 = vsub.s32 1, %v371
      %v373 = vrot.slane %v363, %v372
      %v374 = vmul.f32 %v354, %v369
      %v375 = vmul.f32 %v354, %v373
      %v376 = vadd.f32 %v347, %v374
      %v377 = vadd.f32 %v348, %v375
      %s378 = scalar_lea.vmem %s1, 16
      %v379 = vld [vmem:[%s378] sm:$0xff]
      %381 = vset.pattern.permute.xlu0 0
      %382 = vperm.xlu0 %381, %v379
      %v383 = vpop.permute.xlu0 %382
      %v385 = vlaneseq
      %v386 = vshrl.u32 %v385, 7
      %v387 = vsub.s32 2, %v386
      %v388 = vrot.slane %v318, %v387
      %v389 = vlaneseq
      %v390 = vshrl.u32 %v389, 7
      %v391 = vsub.s32 6, %v390
      %v392 = vrot.slane %v318, %v391
      %v395 = vlaneseq
      %v396 = vshrl.u32 %v395, 7
      %v397 = vsub.s32 2, %v396
      %v398 = vrot.slane %v388, %v397
      %v399 = vlaneseq
      %v400 = vshrl.u32 %v399, 7
      %v401 = vsub.s32 2, %v400
      %v402 = vrot.slane %v392, %v401
      %v403 = vmul.f32 %v383, %v398
      %v404 = vmul.f32 %v383, %v402
      %v405 = vadd.f32 %v376, %v403
      %v406 = vadd.f32 %v377, %v404
      %s407 = scalar_lea.vmem %s1, 24
      %v408 = vld [vmem:[%s407] sm:$0xff]
      %410 = vset.pattern.permute.xlu0 0
      %411 = vperm.xlu0 %410, %v408
      %v412 = vpop.permute.xlu0 %411
      %v414 = vlaneseq
      %v415 = vshrl.u32 %v414, 7
      %v416 = vsub.s32 3, %v415
      %v417 = vrot.slane %v318, %v416
      %v418 = vlaneseq
      %v419 = vshrl.u32 %v418, 7
      %v420 = vsub.s32 7, %v419
      %v421 = vrot.slane %v318, %v420
      %v424 = vlaneseq
      %v425 = vshrl.u32 %v424, 7
      %v426 = vsub.s32 3, %v425
      %v427 = vrot.slane %v417, %v426
      %v428 = vlaneseq
      %v429 = vshrl.u32 %v428, 7
      %v430 = vsub.s32 3, %v429
      %v431 = vrot.slane %v421, %v430
      %v432 = vmul.f32 %v412, %v427
      %v433 = vmul.f32 %v412, %v431
      %v434 = vadd.f32 %v405, %v432
      %v435 = vadd.f32 %v406, %v433
      %437 = vset.pattern.permute.xlu0 0
      %438 = vperm.xlu0 %437, %v319
      %v439 = vpop.permute.xlu0 %438
      %v441 = vadd.f32 %v434, %v439
      %v442 = vadd.f32 %v435, %v439
      %v443 = vmax.f32 %v441, 0.0
      %v444 = vmax.f32 %v442, 0.0
      %v445 = vld [vmem:[%s4] sm:$0xff]
      %v446 = vld [vmem:[%s3] sm:$0xff]
      %448 = vset.pattern.permute.xlu0 0
      %449 = vperm.xlu0 %448, %v446
      %v450 = vpop.permute.xlu0 %449
      %v452 = vlaneseq
      %v453 = vshrl.u32 %v452, 7
      %v454 = vsub.s32 0, %v453
      %v455 = vrot.slane %v443, %v454
      %v456 = vlaneseq
      %v457 = vshrl.u32 %v456, 7
      %v458 = vsub.s32 0, %v457
      %v459 = vrot.slane %v444, %v458
      %v460 = vmul.f32 %v450, %v455
      %v461 = vmul.f32 %v450, %v459
      %v462 = vadd.f32 %v460, 0.0
      %v463 = vadd.f32 %v461, 0.0
      %s464 = scalar_lea.vmem %s3, 8
      %v465 = vld [vmem:[%s464] sm:$0xff]
      %467 = vset.pattern.permute.xlu0 0
      %468 = vperm.xlu0 %467, %v465
      %v469 = vpop.permute.xlu0 %468
      %v471 = vlaneseq
      %v472 = vshrl.u32 %v471, 7
      %v473 = vsub.s32 1, %v472
      %v474 = vrot.slane %v443, %v473
      %v475 = vlaneseq
      %v476 = vshrl.u32 %v475, 7
      %v477 = vsub.s32 1, %v476
      %v478 = vrot.slane %v444, %v477
      %v479 = vmul.f32 %v469, %v474
      %v480 = vmul.f32 %v469, %v478
      %v481 = vadd.f32 %v462, %v479
      %v482 = vadd.f32 %v463, %v480
      %s483 = scalar_lea.vmem %s3, 16
      %v484 = vld [vmem:[%s483] sm:$0xff]
      %486 = vset.pattern.permute.xlu0 0
      %487 = vperm.xlu0 %486, %v484
      %v488 = vpop.permute.xlu0 %487
      %v490 = vlaneseq
      %v491 = vshrl.u32 %v490, 7
      %v492 = vsub.s32 2, %v491
      %v493 = vrot.slane %v443, %v492
      %v494 = vlaneseq
      %v495 = vshrl.u32 %v494, 7
      %v496 = vsub.s32 2, %v495
      %v497 = vrot.slane %v444, %v496
      %v498 = vmul.f32 %v488, %v493
      %v499 = vmul.f32 %v488, %v497
      %v500 = vadd.f32 %v481, %v498
      %v501 = vadd.f32 %v482, %v499
      %s502 = scalar_lea.vmem %s3, 24
      %v503 = vld [vmem:[%s502] sm:$0xff]
      %505 = vset.pattern.permute.xlu0 0
      %506 = vperm.xlu0 %505, %v503
      %v507 = vpop.permute.xlu0 %506
      %v509 = vlaneseq
      %v510 = vshrl.u32 %v509, 7
      %v511 = vsub.s32 3, %v510
      %v512 = vrot.slane %v443, %v511
      %v513 = vlaneseq
      %v514 = vshrl.u32 %v513, 7
      %v515 = vsub.s32 3, %v514
      %v516 = vrot.slane %v444, %v515
      %v517 = vmul.f32 %v507, %v512
      %v518 = vmul.f32 %v507, %v516
      %v519 = vadd.f32 %v500, %v517
      %v520 = vadd.f32 %v501, %v518
      %s521 = scalar_lea.vmem %s3, 32
      %v522 = vld [vmem:[%s521] sm:$0xff]
      %524 = vset.pattern.permute.xlu0 0
      %525 = vperm.xlu0 %524, %v522
      %v526 = vpop.permute.xlu0 %525
      %v528 = vlaneseq
      %v529 = vshrl.u32 %v528, 7
      %v530 = vsub.s32 4, %v529
      %v531 = vrot.slane %v443, %v530
      %v532 = vlaneseq
      %v533 = vshrl.u32 %v532, 7
      %v534 = vsub.s32 4, %v533
      %v535 = vrot.slane %v444, %v534
      %v536 = vmul.f32 %v526, %v531
      %v537 = vmul.f32 %v526, %v535
      %v538 = vadd.f32 %v519, %v536
      %v539 = vadd.f32 %v520, %v537
      %s540 = scalar_lea.vmem %s3, 40
      %v541 = vld [vmem:[%s540] sm:$0xff]
      %543 = vset.pattern.permute.xlu0 0
      %544 = vperm.xlu0 %543, %v541
      %v545 = vpop.permute.xlu0 %544
      %v547 = vlaneseq
      %v548 = vshrl.u32 %v547, 7
      %v549 = vsub.s32 5, %v548
      %v550 = vrot.slane %v443, %v549
      %v551 = vlaneseq
      %v552 = vshrl.u32 %v551, 7
      %v553 = vsub.s32 5, %v552
      %v554 = vrot.slane %v444, %v553
      %v555 = vmul.f32 %v545, %v550
      %v556 = vmul.f32 %v545, %v554
      %v557 = vadd.f32 %v538, %v555
      %v558 = vadd.f32 %v539, %v556
      %s559 = scalar_lea.vmem %s3, 48
      %v560 = vld [vmem:[%s559] sm:$0xff]
      %562 = vset.pattern.permute.xlu0 0
      %563 = vperm.xlu0 %562, %v560
      %v564 = vpop.permute.xlu0 %563
      %v566 = vlaneseq
      %v567 = vshrl.u32 %v566, 7
      %v568 = vsub.s32 6, %v567
      %v569 = vrot.slane %v443, %v568
      %v570 = vlaneseq
      %v571 = vshrl.u32 %v570, 7
      %v572 = vsub.s32 6, %v571
      %v573 = vrot.slane %v444, %v572
      %v574 = vmul.f32 %v564, %v569
      %v575 = vmul.f32 %v564, %v573
      %v576 = vadd.f32 %v557, %v574
      %v577 = vadd.f32 %v558, %v575
      %s578 = scalar_lea.vmem %s3, 56
      %v579 = vld [vmem:[%s578] sm:$0xff]
      %581 = vset.pattern.permute.xlu0 0
      %582 = vperm.xlu0 %581, %v579
      %v583 = vpop.permute.xlu0 %582
      %v585 = vlaneseq
      %v586 = vshrl.u32 %v585, 7
      %v587 = vsub.s32 7, %v586
      %v588 = vrot.slane %v443, %v587
      %v589 = vlaneseq
      %v590 = vshrl.u32 %v589, 7
      %v591 = vsub.s32 7, %v590
      %v592 = vrot.slane %v444, %v591
      %v593 = vmul.f32 %v583, %v588
      %v594 = vmul.f32 %v583, %v592
      %v595 = vadd.f32 %v576, %v593
      %v596 = vadd.f32 %v577, %v594
      %598 = vset.pattern.permute.xlu0 0
      %599 = vperm.xlu0 %598, %v445
      %v600 = vpop.permute.xlu0 %599
      %v602 = vadd.f32 %v595, %v600
      %v603 = vadd.f32 %v596, %v600
      %v604 = vmax.f32 %v602, 0.0
      %v605 = vmax.f32 %v603, 0.0
      %v606 = vld [vmem:[%s6] sm:$0xff]
      %v607 = vld [vmem:[%s5] sm:$0xff]
      %609 = vset.pattern.permute.xlu0 0
      %610 = vperm.xlu0 %609, %v607
      %v611 = vpop.permute.xlu0 %610
      %v613 = vlaneseq
      %v614 = vshrl.u32 %v613, 7
      %v615 = vsub.s32 0, %v614
      %v616 = vrot.slane %v604, %v615
      %v617 = vlaneseq
      %v618 = vshrl.u32 %v617, 7
      %v619 = vsub.s32 0, %v618
      %v620 = vrot.slane %v605, %v619
      %v621 = vmul.f32 %v611, %v616
      %v622 = vmul.f32 %v611, %v620
      %v623 = vadd.f32 %v621, 0.0
      %v624 = vadd.f32 %v622, 0.0
      %s625 = scalar_lea.vmem %s5, 8
      %v626 = vld [vmem:[%s625] sm:$0xff]
      %628 = vset.pattern.permute.xlu0 0
      %629 = vperm.xlu0 %628, %v626
      %v630 = vpop.permute.xlu0 %629
      %v632 = vlaneseq
      %v633 = vshrl.u32 %v632, 7
      %v634 = vsub.s32 1, %v633
      %v635 = vrot.slane %v604, %v634
      %v636 = vlaneseq
      %v637 = vshrl.u32 %v636, 7
      %v638 = vsub.s32 1, %v637
      %v639 = vrot.slane %v605, %v638
      %v640 = vmul.f32 %v630, %v635
      %v641 = vmul.f32 %v630, %v639
      %v642 = vadd.f32 %v623, %v640
      %v643 = vadd.f32 %v624, %v641
      %s644 = scalar_lea.vmem %s5, 16
      %v645 = vld [vmem:[%s644] sm:$0xff]
      %647 = vset.pattern.permute.xlu0 0
      %648 = vperm.xlu0 %647, %v645
      %v649 = vpop.permute.xlu0 %648
      %v651 = vlaneseq
      %v652 = vshrl.u32 %v651, 7
      %v653 = vsub.s32 2, %v652
      %v654 = vrot.slane %v604, %v653
      %v655 = vlaneseq
      %v656 = vshrl.u32 %v655, 7
      %v657 = vsub.s32 2, %v656
      %v658 = vrot.slane %v605, %v657
      %v659 = vmul.f32 %v649, %v654
      %v660 = vmul.f32 %v649, %v658
      %v661 = vadd.f32 %v642, %v659
      %v662 = vadd.f32 %v643, %v660
      %s663 = scalar_lea.vmem %s5, 24
      %v664 = vld [vmem:[%s663] sm:$0xff]
      %666 = vset.pattern.permute.xlu0 0
      %667 = vperm.xlu0 %666, %v664
      %v668 = vpop.permute.xlu0 %667
      %v670 = vlaneseq
      %v671 = vshrl.u32 %v670, 7
      %v672 = vsub.s32 3, %v671
      %v673 = vrot.slane %v604, %v672
      %v674 = vlaneseq
      %v675 = vshrl.u32 %v674, 7
      %v676 = vsub.s32 3, %v675
      %v677 = vrot.slane %v605, %v676
      %v678 = vmul.f32 %v668, %v673
      %v679 = vmul.f32 %v668, %v677
      %v680 = vadd.f32 %v661, %v678
      %v681 = vadd.f32 %v662, %v679
      %s682 = scalar_lea.vmem %s5, 32
      %v683 = vld [vmem:[%s682] sm:$0xff]
      %685 = vset.pattern.permute.xlu0 0
      %686 = vperm.xlu0 %685, %v683
      %v687 = vpop.permute.xlu0 %686
      %v689 = vlaneseq
      %v690 = vshrl.u32 %v689, 7
      %v691 = vsub.s32 4, %v690
      %v692 = vrot.slane %v604, %v691
      %v693 = vlaneseq
      %v694 = vshrl.u32 %v693, 7
      %v695 = vsub.s32 4, %v694
      %v696 = vrot.slane %v605, %v695
      %v697 = vmul.f32 %v687, %v692
      %v698 = vmul.f32 %v687, %v696
      %v699 = vadd.f32 %v680, %v697
      %v700 = vadd.f32 %v681, %v698
      %s701 = scalar_lea.vmem %s5, 40
      %v702 = vld [vmem:[%s701] sm:$0xff]
      %704 = vset.pattern.permute.xlu0 0
      %705 = vperm.xlu0 %704, %v702
      %v706 = vpop.permute.xlu0 %705
      %v708 = vlaneseq
      %v709 = vshrl.u32 %v708, 7
      %v710 = vsub.s32 5, %v709
      %v711 = vrot.slane %v604, %v710
      %v712 = vlaneseq
      %v713 = vshrl.u32 %v712, 7
      %v714 = vsub.s32 5, %v713
      %v715 = vrot.slane %v605, %v714
      %v716 = vmul.f32 %v706, %v711
      %v717 = vmul.f32 %v706, %v715
      %v718 = vadd.f32 %v699, %v716
      %v719 = vadd.f32 %v700, %v717
      %s720 = scalar_lea.vmem %s5, 48
      %v721 = vld [vmem:[%s720] sm:$0xff]
      %723 = vset.pattern.permute.xlu0 0
      %724 = vperm.xlu0 %723, %v721
      %v725 = vpop.permute.xlu0 %724
      %v727 = vlaneseq
      %v728 = vshrl.u32 %v727, 7
      %v729 = vsub.s32 6, %v728
      %v730 = vrot.slane %v604, %v729
      %v731 = vlaneseq
      %v732 = vshrl.u32 %v731, 7
      %v733 = vsub.s32 6, %v732
      %v734 = vrot.slane %v605, %v733
      %v735 = vmul.f32 %v725, %v730
      %v736 = vmul.f32 %v725, %v734
      %v737 = vadd.f32 %v718, %v735
      %v738 = vadd.f32 %v719, %v736
      %s739 = scalar_lea.vmem %s5, 56
      %v740 = vld [vmem:[%s739] sm:$0xff]
      %742 = vset.pattern.permute.xlu0 0
      %743 = vperm.xlu0 %742, %v740
      %v744 = vpop.permute.xlu0 %743
      %v746 = vlaneseq
      %v747 = vshrl.u32 %v746, 7
      %v748 = vsub.s32 7, %v747
      %v749 = vrot.slane %v604, %v748
      %v750 = vlaneseq
      %v751 = vshrl.u32 %v750, 7
      %v752 = vsub.s32 7, %v751
      %v753 = vrot.slane %v605, %v752
      %v754 = vmul.f32 %v744, %v749
      %v755 = vmul.f32 %v744, %v753
      %v756 = vadd.f32 %v737, %v754
      %v757 = vadd.f32 %v738, %v755
      %759 = vset.pattern.permute.xlu0 0
      %760 = vperm.xlu0 %759, %v606
      %v761 = vpop.permute.xlu0 %760
      %v763 = vadd.f32 %v756, %v761
      %v764 = vadd.f32 %v757, %v761
      %v765 = vmax.f32 %v763, 0.0
      %v766 = vmax.f32 %v764, 0.0
      %767 = vst [vmem:[%s316] sm:$0xff] %v765
      %768 = vst [vmem:[%s316 + $0x8] sm:$0xff] %v766
      %s769 = smul.u32 2, %s23
      %p770 = scmp.lt.s32.totalorder %s22, 1
      %s771 = scalar_select %p770, %s22, 1
      %p772 = scmp.lt.s32.totalorder %s769, 1
      %s773 = scalar_select %p772, %s769, 1
      %s774 = smul.addr %s771, 2
      %s775 = sadd.s32 %s773, %s774
      %s776 = smul.addr %s775, 8
      %s777 = scalar_lea.vmem %s7, %s776
      // Predicated region
      $region49: #{fused_mlp_block.1} parent=47 // pred_check
        %p778 = pneg %p204
      $region50: #{fused_mlp_block.1} parent=47 // pred_check_branch
        %780 = sbr.rel (%p778) target = $region52
      $region51: #{fused_mlp_block.1} parent=47 // pred_region
        %s781 = smul.u32 2, %s23
      $region52: #{fused_mlp_block.1} parent=47 // pred_fallthru
        _
    $region48: #{fused_mlp_block.1} parent=5 // pred_fallthru
      _
    %p782 = scmp.le.s32.totalorder 2, %s13
    // Predicated region
    $region53: #{fused_mlp_block.1} parent=5 // pred_check
      %p783 = pneg %p782
    $region54: #{fused_mlp_block.1} parent=5 // pred_check_branch
      %785 = sbr.rel (%p783) target = $region56
    $region55: #{fused_mlp_block.1} parent=5 // pred_region
      %s786 = ssub.s32 %s13, 2
      // Predicated region
      $region57: #{fused_mlp_block.1} parent=55 // pred_check
        %p787 = pneg %p210
      $region58: #{fused_mlp_block.1} parent=55 // pred_check_branch
        %789 = sbr.rel (%p787) target = $region60
      $region59: #{fused_mlp_block.1} parent=55 // pred_region
        %s790 = smul.u32 2, %s25
        %p791 = scmp.lt.s32.totalorder %s24, 1
        %s792 = scalar_select %p791, %s24, 1
        %p793 = scmp.lt.s32.totalorder %s790, 1
        %s794 = scalar_select %p793, %s790, 1
        %s795 = smul.addr %s792, 2
        %s796 = sadd.s32 %s794, %s795
        %s797 = smul.addr %s796, 8
        %s798 = scalar_lea.vmem %s7, %s797
      $region60: #{fused_mlp_block.1} parent=55 // pred_fallthru
        _
    $region56: #{fused_mlp_block.1} parent=5 // pred_fallthru
      _
  $region6: #{fused_mlp_block.1} parent=0 // loop_footer
    %s17 = sadd.s32 1, %s13
  $region7: #{fused_mlp_block.1} parent=0 // loop_footer_branch
    %12 = sbr.rel target = $region3
  $region8: #{fused_mlp_block.1} parent=0 // loop_exit
    _

</llo_original>
